<compile_context>
chip_gen: v5e
topology: v5e:2x2
jax: 0.10.0
libtpu: 0.0.40
codegen_flags: <defaults>
</compile_context>

<pallas_src>
import functools

import jax
import jax.numpy as jnp
from jax import lax
from jax.experimental import pallas as pl
from jax.experimental.pallas import tpu as pltpu


def _round_up(x, m):
    return ((x + m - 1) // m) * m


def _choose_block_rows(n_rows, stream_bytes_per_row, temp_bytes_per_row,
                       target_stream_bytes=2 << 20,
                       vmem_budget_bytes=24 << 20,
                       max_rows=4096):
    """Pick a row-tile size.

    Targets ~target_stream_bytes of streamed HBM input per grid step (per-step
    overhead is ~0.35us, so sub-MB steps leave roofline on the table), capped
    by a VMEM budget covering double-buffered streamed inputs plus the f32
    temporaries the kernel body materialises.
    """
    rows_by_stream = -(-target_stream_bytes // max(stream_bytes_per_row, 1))
    rows_by_vmem = vmem_budget_bytes // max(
        2 * stream_bytes_per_row + temp_bytes_per_row, 1)
    rows = min(rows_by_stream, rows_by_vmem, max_rows)
    rows = max(8, (rows // 8) * 8)
    rows = min(rows, _round_up(n_rows, 8))
    # Guarantee >= 2 grid steps when there is enough work: v7x has 2 TCs per
    # chip sharing the "parallel" grid axis; a single-tile grid idles one TC.
    if n_rows > 8:
        rows = min(rows, max(8, _round_up(-(-n_rows // 2), 8)))
    return max(8, rows)


def _row_mask(loss, tile_idx, block_rows, total_rows):
    """Zero padded rows of the last (ragged) tile. Must be a select, not a
    multiply: OOB garbage can be NaN/inf through exp/log and only a select
    masks that correctly."""
    row = tile_idx * block_rows + lax.broadcasted_iota(
        jnp.int32, (block_rows, 1), 0)
    return jnp.where(row < total_rows, loss, 0.0)


def _dense_kernel(x_ref, t_ref, out_ref, *, confidence, smoothing,
                  num_classes, total_rows, block_rows):
    """Soft / dense-distribution targets: streams x and target."""
    i = pl.program_id(0)

    x = x_ref[...].astype(jnp.float32)                    # (TM, C)
    t = t_ref[...].astype(jnp.float32)                    # (TM, C)

    # Fused, stable log-softmax reduction (logprobs never materialized):
    #   loss = sum_w * log(sum(exp(x-m)))
    #          - confidence*sum((x-m)*t) - (smoothing/C)*sum(x-m)
    #   sum_w = confidence*sum(t) + smoothing (no assumption that t sums to 1)
    m = jnp.max(x, axis=-1, keepdims=True)
    shifted = x - m
    log_denom = jnp.log(jnp.sum(jnp.exp(shifted), axis=-1, keepdims=True))

    sum_t = jnp.sum(t, axis=-1, keepdims=True)
    sum_w = jnp.float32(confidence) * sum_t + jnp.float32(smoothing)
    dot_xt = jnp.sum(shifted * t, axis=-1, keepdims=True)
    sum_x = jnp.sum(shifted, axis=-1, keepdims=True)

    loss = (sum_w * log_denom
            - jnp.float32(confidence) * dot_xt
            - jnp.float32(smoothing / num_classes) * sum_x)    # (TM, 1)

    loss = _row_mask(loss, i, block_rows, total_rows)

    # Lane-dense, unmasked store of this tile's partial sum.
    out_ref[...] = jnp.full(out_ref.shape, jnp.sum(loss), dtype=jnp.float32)


def _onehot_kernel(x_ref, lbl_ref, out_ref, *, confidence, smoothing,
                   num_classes, total_rows, block_rows):
    """Integer class labels (one-hot targets): streams only x (+ tiny labels)."""
    i = pl.program_id(0)

    x = x_ref[...].astype(jnp.float32)                    # (TM, C)
    labels = lbl_ref[...]                                 # (TM, 1) int32

    m = jnp.max(x, axis=-1, keepdims=True)
    shifted = x - m
    log_denom = jnp.log(jnp.sum(jnp.exp(shifted), axis=-1, keepdims=True))

    cls = lax.broadcasted_iota(jnp.int32, x.shape, 1)      # (TM, C)
    x_lab = jnp.sum(jnp.where(cls == labels, shifted, 0.0),
                    axis=-1, keepdims=True)                # shifted[label]
    sum_x = jnp.sum(shifted, axis=-1, keepdims=True)

    # One-hot targets sum to 1  =>  sum_w = confidence + smoothing = 1.
    loss = (log_denom
            - jnp.float32(confidence) * x_lab
            - jnp.float32(smoothing / num_classes) * sum_x)    # (TM, 1)

    loss = _row_mask(loss, i, block_rows, total_rows)
    out_ref[...] = jnp.full(out_ref.shape, jnp.sum(loss), dtype=jnp.float32)


def label_smoothing_loss(x, target, smoothing=0.1, block_rows=None,
                         vmem_limit_bytes=None, buffer_count=None):
    """Pallas implementation of LabelSmoothing.forward (training mode).

    x:      [N, C] logits (any float dtype; cast to f32 inside the kernel).
    target: either a dense [N, C] distribution (soft / one-hot), or an
            integer [N] class-index vector (fast path: ~half the HBM traffic).
    Returns a float32 scalar (mean loss).
    """
    assert x.ndim == 2
    N, C = x.shape
    confidence = 1.0 - smoothing

    dense = (target.ndim == 2)
    if dense:
        assert target.shape == (N, C)
    else:
        assert target.ndim == 1 and target.shape[0] == N

    x_item = jnp.dtype(x.dtype).itemsize
    if dense:
        stream_per_row = C * (x_item + jnp.dtype(target.dtype).itemsize)
    else:
        stream_per_row = C * x_item + 4           # int32 label column
    temp_per_row = C * 4 * 5                      # ~5 full-width f32 temporaries

    if block_rows is None:
        block_rows = _choose_block_rows(N, stream_per_row, temp_per_row)
    block_rows = max(8, _round_up(block_rows, 8))
    num_tiles = pl.cdiv(N, block_rows)            # no wrapper-side padding

    if vmem_limit_bytes is None:
        tile_bytes = block_rows * (2 * stream_per_row + temp_per_row)
        tile_bytes += 2 * (8 * 128 * 4)           # double-buffered output tile
        # Headroom, but capped at 48 MiB (safe on v7x's 64 MiB VMEM per TC).
        vmem_limit_bytes = int(min(48 << 20, max(2 * tile_bytes, 8 << 20)))

    def _in_spec(shape, index_map):
        if buffer_count is None:
            return pl.BlockSpec(shape, index_map)
        return pl.BlockSpec(shape, index_map,
                            pipeline_mode=pl.Buffered(buffer_count))

    x_spec = _in_spec((block_rows, C), lambda i: (i, 0))
    out_spec = pl.BlockSpec((1, 8, 128), lambda i: (i, 0, 0))
    out_shape = jax.ShapeDtypeStruct((num_tiles, 8, 128), jnp.float32)

    if dense:
        kernel = functools.partial(
            _dense_kernel, confidence=confidence, smoothing=smoothing,
            num_classes=C, total_rows=N, block_rows=block_rows)
        t_spec = _in_spec((block_rows, C), lambda i: (i, 0))
        operands = (x, target)
    else:
        labels = target.astype(jnp.int32).reshape(N, 1)
        kernel = functools.partial(
            _onehot_kernel, confidence=confidence, smoothing=smoothing,
            num_classes=C, total_rows=N, block_rows=block_rows)
        t_spec = _in_spec((block_rows, 1), lambda i: (i, 0))
        operands = (x, labels)

    partials = pl.pallas_call(
        kernel,
        out_shape=out_shape,
        grid_spec=pltpu.PrefetchScalarGridSpec(
            num_scalar_prefetch=0,
            grid=(num_tiles,),
            in_specs=[x_spec, t_spec],
            out_specs=out_spec,
        ),
        compiler_params=pltpu.CompilerParams(
            dimension_semantics=("parallel",),    # independent per-tile partials
            vmem_limit_bytes=vmem_limit_bytes,
        ),
    )(*operands)

    # Final reduce + mean in plain JAX (tiny: num_tiles scalars).
    return jnp.sum(partials[:, 0, 0]) / jnp.float32(N)


def _reference(x, target_dense, smoothing=0.1):
    confidence = 1.0 - smoothing
    xf = x.astype(jnp.float32)
    tf = target_dense.astype(jnp.float32)
    logprobs = jax.nn.log_softmax(xf, axis=-1)
    nll = -jnp.sum(logprobs * tf, axis=-1)
    smooth = -jnp.mean(logprobs, axis=-1)
    return jnp.mean(confidence * nll + smoothing * smooth)


if __name__ == "__main__":
    key = jax.random.PRNGKey(0)
    kx, kt, kx2, kt2 = jax.random.split(key, 4)

    # Small shapes: batch rows = 8, classes = 32.
    N, C = 8, 32
    x = jax.random.normal(kx, (N, C), dtype=jnp.float32)
    labels = jax.random.randint(kt, (N,), 0, C)
    target = jax.nn.one_hot(labels, C, dtype=jnp.float32)
    ref = _reference(x, target, smoothing=0.1)

    # 1) Dense soft-target path.
    loss_dense = jax.block_until_ready(label_smoothing_loss(x, target, 0.1))
    assert jnp.allclose(loss_dense, ref, atol=1e-5, rtol=1e-5), (loss_dense, ref)

    # 2) Integer-label fast path (one-hot targets, less HBM traffic).
    loss_idx = jax.block_until_ready(label_smoothing_loss(x, labels, 0.1))
    assert jnp.allclose(loss_idx, ref, atol=1e-5, rtol=1e-5), (loss_idx, ref)

    # 3) bf16 inputs on the wire, ragged N handled in-kernel (no jnp.pad),
    #    explicit block_rows=8 -> multi-tile grid with a partial last tile.
    N2 = 12
    x2 = jax.random.normal(kx2, (N2, C), dtype=jnp.bfloat16)
    labels2 = jax.random.randint(kt2, (N2,), 0, C)
    target2 = jax.nn.one_hot(labels2, C, dtype=jnp.bfloat16)
    ref2 = _reference(x2, target2, smoothing=0.1)
    loss2 = jax.block_until_ready(
        label_smoothing_loss(x2, target2, 0.1, block_rows=8))
    assert jnp.allclose(loss2, ref2, atol=1e-4, rtol=1e-4), (loss2, ref2)

    # 4) Same ragged case, integer labels, automatic block sizing
    #    (auto picks block_rows=8 here -> 2-step parallel grid).
    loss3 = jax.block_until_ready(label_smoothing_loss(x2, labels2, 0.1))
    assert jnp.allclose(loss3, ref2, atol=1e-4, rtol=1e-4), (loss3, ref2)

    print("KERNEL_OK")
</pallas_src>

<mosaic_0001>
module attributes {stable_mosaic.version = 11 : i64} {
  func.func @_dense_kernel(%arg0: i32, %arg1: memref<8x32xf32, #tpu.memory_space<vmem>>, %arg2: memref<8x32xf32, #tpu.memory_space<vmem>>, %arg3: memref<1x8x128xf32, #tpu.memory_space<vmem>>) attributes {dimension_semantics = [#tpu.dimension_semantics<parallel>], iteration_bounds = array<i64: 1>, scalar_prefetch = 0 : i64, scratch_operands = 0 : i64, tpu.core_type = #tpu.core_type<tc>, window_params = [{transform_indices = @transform_0, window_bounds = array<i64: 8, 32>}, {transform_indices = @transform_1, window_bounds = array<i64: 8, 32>}, {transform_indices = @transform_2, window_bounds = array<i64: 1, 8, 128>}]} {
    %c0 = arith.constant 0 : index
    %c0_0 = arith.constant 0 : index
    %0 = vector.load %arg1[%c0, %c0_0] : memref<8x32xf32, #tpu.memory_space<vmem>>, vector<8x32xf32>
    %c0_1 = arith.constant 0 : index
    %c0_2 = arith.constant 0 : index
    %1 = vector.load %arg2[%c0_1, %c0_2] : memref<8x32xf32, #tpu.memory_space<vmem>>, vector<8x32xf32>
    %cst = arith.constant dense<0xFF800000> : vector<8xf32>
    %2 = vector.multi_reduction <maximumf>, %0, %cst [1] : vector<8x32xf32> to vector<8xf32>
    %3 = vector.shape_cast %2 : vector<8xf32> to vector<8x1xf32>
    %4 = vector.broadcast %3 : vector<8x1xf32> to vector<8x32xf32>
    %5 = arith.subf %0, %4 : vector<8x32xf32>
    %6 = math.exp %5 : vector<8x32xf32>
    %cst_3 = arith.constant dense<0.000000e+00> : vector<8xf32>
    %7 = vector.multi_reduction <add>, %6, %cst_3 [1] : vector<8x32xf32> to vector<8xf32>
    %8 = vector.shape_cast %7 : vector<8xf32> to vector<8x1xf32>
    %9 = math.log %8 : vector<8x1xf32>
    %cst_4 = arith.constant dense<0.000000e+00> : vector<8xf32>
    %10 = vector.multi_reduction <add>, %1, %cst_4 [1] : vector<8x32xf32> to vector<8xf32>
    %11 = vector.shape_cast %10 : vector<8xf32> to vector<8x1xf32>
    %cst_5 = arith.constant 0.899999976 : f32
    %12 = vector.broadcast %cst_5 : f32 to vector<8x1xf32>
    %13 = arith.mulf %12, %11 : vector<8x1xf32>
    %cst_6 = arith.constant 1.000000e-01 : f32
    %14 = vector.broadcast %cst_6 : f32 to vector<8x1xf32>
    %15 = arith.addf %13, %14 : vector<8x1xf32>
    %16 = arith.mulf %5, %1 : vector<8x32xf32>
    %cst_7 = arith.constant dense<0.000000e+00> : vector<8xf32>
    %17 = vector.multi_reduction <add>, %16, %cst_7 [1] : vector<8x32xf32> to vector<8xf32>
    %18 = vector.shape_cast %17 : vector<8xf32> to vector<8x1xf32>
    %cst_8 = arith.constant dense<0.000000e+00> : vector<8xf32>
    %19 = vector.multi_reduction <add>, %5, %cst_8 [1] : vector<8x32xf32> to vector<8xf32>
    %20 = vector.shape_cast %19 : vector<8xf32> to vector<8x1xf32>
    %21 = arith.mulf %15, %9 : vector<8x1xf32>
    %cst_9 = arith.constant 0.899999976 : f32
    %22 = vector.broadcast %cst_9 : f32 to vector<8x1xf32>
    %23 = arith.mulf %22, %18 : vector<8x1xf32>
    %24 = arith.subf %21, %23 : vector<8x1xf32>
    %cst_10 = arith.constant 3.125000e-03 : f32
    %25 = vector.broadcast %cst_10 : f32 to vector<8x1xf32>
    %26 = arith.mulf %25, %20 : vector<8x1xf32>
    %27 = arith.subf %24, %26 : vector<8x1xf32>
    %c8_i32 = arith.constant 8 : i32
    %28 = arith.muli %arg0, %c8_i32 : i32
    %29 = tpu.iota {dimensions = array<i32: 0>} : vector<8x1xi32>
    %30 = vector.broadcast %28 : i32 to vector<8x1xi32>
    %31 = arith.addi %30, %29 : vector<8x1xi32>
    %c8_i32_11 = arith.constant 8 : i32
    %32 = vector.broadcast %c8_i32_11 : i32 to vector<8x1xi32>
    %33 = arith.cmpi slt, %31, %32 : vector<8x1xi32>
    %cst_12 = arith.constant 0.000000e+00 : f32
    %34 = vector.broadcast %cst_12 : f32 to vector<8x1xf32>
    %35 = arith.select %33, %27, %34 : vector<8x1xi1>, vector<8x1xf32>
    %36 = vector.shape_cast %35 : vector<8x1xf32> to vector<1x8x1xf32>
    %cst_13 = arith.constant dense<0.000000e+00> : vector<1xf32>
    %37 = vector.multi_reduction <add>, %36, %cst_13 [1, 2] : vector<1x8x1xf32> to vector<1xf32>
    %38 = vector.shape_cast %37 : vector<1xf32> to vector<1x1x1xf32>
    %39 = vector.extract %38[0, 0, 0] : f32 from vector<1x1x1xf32>
    %40 = vector.broadcast %39 : f32 to vector<1x8x128xf32>
    %c0_14 = arith.constant 0 : index
    %c0_15 = arith.constant 0 : index
    %c0_16 = arith.constant 0 : index
    %41 = vector.load %arg3[%c0_14, %c0_15, %c0_16] : memref<1x8x128xf32, #tpu.memory_space<vmem>>, vector<1x8x128xf32>
    tpu.vector_store %arg3[%c0_14, %c0_15, %c0_16], %40 {strides = array<i32>} : memref<1x8x128xf32, #tpu.memory_space<vmem>>, vector<1x8x128xf32>,
    return
  }
  func.func @transform_0(%arg0: i32) -> (i32, i32) {
    %c0_i32 = arith.constant 0 : i32
    %c0_i32_0 = arith.constant 0 : i32
    return %arg0, %c0_i32 : i32, i32
  }
  func.func @transform_1(%arg0: i32) -> (i32, i32) {
    %c0_i32 = arith.constant 0 : i32
    %c0_i32_0 = arith.constant 0 : i32
    return %arg0, %c0_i32 : i32, i32
  }
  func.func @transform_2(%arg0: i32) -> (i32, i32, i32) {
    %c0_i32 = arith.constant 0 : i32
    %c0_i32_0 = arith.constant 0 : i32
    %c0_i32_1 = arith.constant 0 : i32
    return %arg0, %c0_i32, %c0_i32_0 : i32, i32, i32
  }
}

</mosaic_0001>

<llo_original>
// kernel: tpu_custom_call.1
$region0: #{tpu_custom_call.1}
  #allocation0 [shape = 'u32[]', space=smem, size = 0x4, offset = 0x4, fixed_abs, tag = 'smem constant byte address 0x4 - core index']
  #allocation1 [shape = 'u32[72,128]{1,0:T(1,128)}', space=vmem, size = 0x9000, scoped, tag = 'internal scratch']
  %s0 = inlined_call_operand.hbm [shape: f32[8,32], index: 0, kind: input, shape index: {}]
  %s1 = inlined_call_operand.hbm [shape: f32[8,32], index: 1, kind: input, shape index: {}]
  %s2 = inlined_call_operand.hbm [shape: f32[1,8,128], index: 2, kind: output, shape index: {}]
  %s3 = sld [smem:[#allocation0]]
  $region26: #{tpu_custom_call.1} parent=0
    _
  %s5 = ssub.s32 1, %s3
  %s6 = scalar_select 0, %s5, %s3
  $region1: #{tpu_custom_call.1} parent=0
    #allocation2 [shape = 'u8[4096]{0}', space=vmem, size = 0x1000, scoped, tag = 'input window, operand 0, single buffered']
    #allocation3 [shape = 's32[1]{0}', space=sflag, size = 0x4, scoped, tag = 'scoped memory for tpu_custom_call.1']
    #allocation4 [shape = 's32[1]{0}', space=sflag, size = 0x4, scoped, tag = 'scoped memory for tpu_custom_call.1']
    #allocation5 [shape = 'u8[4096]{0}', space=vmem, size = 0x1000, scoped, tag = 'input window, operand 1, single buffered']
    #allocation6 [shape = 's32[1]{0}', space=sflag, size = 0x4, scoped, tag = 'scoped memory for tpu_custom_call.1']
    #allocation7 [shape = 'u8[4096]{0}', space=vmem, size = 0x1000, scoped, tag = 'output window, operand 0, single buffered']
    %7 = vsyncpa [#allocation3], 0
    %8 = vsyncpa [#allocation6], 0
    %9 = vsyncpa [#allocation4], 0
    // Predicated region
    $region2: #{tpu_custom_call.1} parent=1 // pred_check
      _
    $region3: #{tpu_custom_call.1} parent=1 // pred_check_branch
      %11 = sbr.rel (0) target = $region5
    $region4: #{tpu_custom_call.1} parent=1 // pred_region
      %13 = vsyncadd [#allocation3], 0
      %s15 = sshll.u32 %s0, 4
      %s16 = int_to_ptr.hbm [resolvable:$true] %s15
      %s17 = sshll.u32 [#allocation2], 4
      %s18 = int_to_ptr.vmem [resolvable:$true] %s17
      %20 = dma.hbm_to_vmem [thread:$0]  %s16, 128, %s18, [#allocation3]
    $region5: #{tpu_custom_call.1} parent=1 // pred_fallthru
      _
    // Predicated region
    $region6: #{tpu_custom_call.1} parent=1 // pred_check
      _
    $region7: #{tpu_custom_call.1} parent=1 // pred_check_branch
      %22 = sbr.rel (0) target = $region9
    $region8: #{tpu_custom_call.1} parent=1 // pred_region
      %24 = vsyncadd [#allocation6], 0
      %s26 = sshll.u32 %s1, 4
      %s27 = int_to_ptr.hbm [resolvable:$true] %s26
      %s28 = sshll.u32 [#allocation5], 4
      %s29 = int_to_ptr.vmem [resolvable:$true] %s28
      %31 = dma.hbm_to_vmem [thread:$0]  %s27, 128, %s29, [#allocation6]
    $region9: #{tpu_custom_call.1} parent=1 // pred_fallthru
      _
    // Predicated region
    $region10: #{tpu_custom_call.1} parent=1 // pred_check
      _
    $region11: #{tpu_custom_call.1} parent=1 // pred_check_branch
      %33 = sbr.rel (0) target = $region13
    $region12: #{tpu_custom_call.1} parent=1 // pred_region
      %35 = dma.done [#allocation3], 128
    $region13: #{tpu_custom_call.1} parent=1 // pred_fallthru
      _
    // Predicated region
    $region14: #{tpu_custom_call.1} parent=1 // pred_check
      _
    $region15: #{tpu_custom_call.1} parent=1 // pred_check_branch
      %37 = sbr.rel (0) target = $region17
    $region16: #{tpu_custom_call.1} parent=1 // pred_region
      %39 = dma.done [#allocation6], 128
    $region17: #{tpu_custom_call.1} parent=1 // pred_fallthru
      _
    %v40 = vld [vmem:[#allocation2] sm:$0xff]
    %v41 = vld [vmem:[#allocation5] sm:$0xff]
    %vm42 = vcmask 261120
    %v43 = vsel %vm42, %v40, -inf
    %44 = vmax.xlane.f32.xlu0 %v43
    %v45 = vpop.xlane.xlu0 %44
    %v46 = vsub.f32 %v40, %v45
    %v47 = vmul.f32 %v46, 1.442695
    %v48 = vpow.pop %v47
    %v49 = vsel %vm42, %v48, 0.0
    %50 = vadd.xlane.f32.xlu0 %v49
    %v51 = vpop.xlane.xlu0 %50
    %v52 = vlog2.pop %v51
    %v53 = vmul.f32 %v52, 0.6931472
    %v54 = vsel %vm42, %v41, 0.0
    %55 = vadd.xlane.f32.xlu0 %v54
    %v56 = vpop.xlane.xlu0 %55
    %v57 = vmul.f32 %v56, 0.9
    %v58 = vadd.f32 %v57, 0.1
    %v59 = vmul.f32 %v46, %v41
    %v60 = vsel %vm42, %v59, 0.0
    %61 = vadd.xlane.f32.xlu0 %v60
    %v62 = vpop.xlane.xlu0 %61
    %v63 = vsel %vm42, %v46, 0.0
    %64 = vadd.xlane.f32.xlu0 %v63
    %v65 = vpop.xlane.xlu0 %64
    %v66 = vmul.f32 %v58, %v53
    %v67 = vmul.f32 %v62, 0.9
    %v68 = vsub.f32 %v66, %v67
    %v69 = vmul.f32 %v65, 0.003125
    %v70 = vsub.f32 %v68, %v69
    %s71 = smul.u32 0, 8
    %v72 = vlaneseq
    %v73 = vshrl.u32 %v72, 7
    %v74 = vstv %s71
    %v75 = vadd.s32 %v74, %v73
    %vm76 = vcmp.lt.s32.totalorder %v75, 8
    %v77 = vsel %vm76, %v70, 0.0
    %vm78 = vcmask 7168
    %v79 = vsel %vm78, %v77, 0.0
    %80 = vadd.xlane.f32.xlu0 %v79
    %v81 = vpop.xlane.xlu0 %80
    %v82 = vrot.slane %v81, 4
    %v83 = vadd.f32 %v81, %v82
    %v84 = vrot.slane %v83, 2
    %v85 = vadd.f32 %v83, %v84
    %v86 = vrot.slane %v85, 1
    %v87 = vadd.f32 %v85, %v86
    %s88 = vtos %v87
    %v89 = vstv %s88
    %90 = vst [vmem:[#allocation7] sm:$0xff] %v89
    // Predicated region
    $region18: #{tpu_custom_call.1} parent=1 // pred_check
      _
    $region19: #{tpu_custom_call.1} parent=1 // pred_check_branch
      %92 = sbr.rel (0) target = $region21
    $region20: #{tpu_custom_call.1} parent=1 // pred_region
      %94 = vsyncadd [#allocation4], 0
      %s96 = sshll.u32 [#allocation7], 4
      %s97 = int_to_ptr.vmem [resolvable:$true] %s96
      %s98 = sshll.u32 %s2, 4
      %s99 = int_to_ptr.hbm [resolvable:$true] %s98
      %101 = dma.vmem_to_hbm [thread:$0]  %s97, 128, %s99, [#allocation4]
    $region21: #{tpu_custom_call.1} parent=1 // pred_fallthru
      _
    // Predicated region
    $region22: #{tpu_custom_call.1} parent=1 // pred_check
      _
    $region23: #{tpu_custom_call.1} parent=1 // pred_check_branch
      %103 = sbr.rel (0) target = $region25
    $region24: #{tpu_custom_call.1} parent=1 // pred_region
      %105 = dma.done [#allocation4], 128
    $region25: #{tpu_custom_call.1} parent=1 // pred_fallthru
      _
    %106 = vsyncpa [#allocation3], 1
    %107 = vsyncpa [#allocation6], 1
    %108 = vsyncpa [#allocation4], 1

</llo_original>
